<compile_context>
chip_gen: v7x
topology: tpu7x:2x2x1
jax: 0.10.0
libtpu: 0.0.40
codegen_flags: <defaults>
</compile_context>

<pallas_src>
import functools

import jax
import jax.numpy as jnp
from jax.experimental import pallas as pl
from jax.experimental.pallas import tpu as pltpu

EPS = 1e-5  # PyTorch BatchNorm1d default eps


# ----------------------------------------------------------------------------
# Small shared helpers
# ----------------------------------------------------------------------------
def _bn_train(x, gamma, beta):
    """PyTorch BatchNorm1d, training mode: batch stats over rows, biased var."""
    mean = jnp.mean(x, axis=0, keepdims=True)
    var = jnp.mean(jnp.square(x - mean), axis=0, keepdims=True)
    return gamma * (x - mean) * jax.lax.rsqrt(var + EPS) + beta


def _bn_affine(part_sum, part_sq, count, gamma, beta):
    """Fold training-mode BN into per-channel affine y = a*z + d from per-batch
    partial sums of z and z*z (the preceding conv bias cancels exactly)."""
    s = jnp.sum(part_sum, axis=0, keepdims=True)
    q = jnp.sum(part_sq, axis=0, keepdims=True)
    mean = s / count
    var = q / count - mean * mean            # biased variance (training mode)
    a = gamma * jax.lax.rsqrt(var + EPS)
    d = beta - mean * a
    return a, d


def _conv1(x, w1):
    """1x1 Conv1d with Cin=k (tiny): k VPU FMAs instead of a K=3 MXU matmul."""
    z = x[:, 0:1] * w1[0:1, :]
    for c in range(1, w1.shape[0]):          # k is static (3)
        z = z + x[:, c:c + 1] * w1[c:c + 1, :]
    return z


def _pick_tile(n, max_tile):
    """Largest row tile <= max_tile that divides n and is a multiple of 8."""
    if n % 8 != 0:
        raise ValueError("number of points N must be a multiple of 8")
    t = max(8, min(max_tile, n))
    t -= t % 8
    while t > 8 and n % t != 0:
        t -= 8
    return t


# ----------------------------------------------------------------------------
# Kernels
# ----------------------------------------------------------------------------
def _stats1_kernel(x_ref, w1_ref, s_ref, q_ref):
    """Pass 1: per-batch partial sum / sum-sq of z1 = conv1(x) (pre-BN)."""
    @pl.when(pl.program_id(1) == 0)
    def _():
        s_ref[...] = jnp.zeros_like(s_ref)
        q_ref[...] = jnp.zeros_like(q_ref)

    z1 = _conv1(x_ref[...], w1_ref[...])                       # (T, 64) f32
    s_ref[0:1, :] = s_ref[0:1, :] + jnp.sum(z1, axis=0, keepdims=True)
    q_ref[0:1, :] = q_ref[0:1, :] + jnp.sum(z1 * z1, axis=0, keepdims=True)


def _stats2_kernel(x_ref, w1_ref, a1_ref, d1_ref, w2_ref, s_ref, q_ref):
    """Pass 2: recompute h1, accumulate stats of z2 = conv2(h1) (pre-BN)."""
    @pl.when(pl.program_id(1) == 0)
    def _():
        s_ref[...] = jnp.zeros_like(s_ref)
        q_ref[...] = jnp.zeros_like(q_ref)

    h1 = jnp.maximum(_conv1(x_ref[...], w1_ref[...]) * a1_ref[...] + d1_ref[...], 0.0)
    z2 = jnp.dot(h1.astype(jnp.bfloat16), w2_ref[...],          # bf16 MXU, f32 acc
                 preferred_element_type=jnp.float32)             # (T, 128)
    s_ref[0:1, :] = s_ref[0:1, :] + jnp.sum(z2, axis=0, keepdims=True)
    q_ref[0:1, :] = q_ref[0:1, :] + jnp.sum(z2 * z2, axis=0, keepdims=True)


def _conv3_kernel(x_ref, w1_ref, a1_ref, d1_ref, w2_ref, a2_ref, d2_ref, w3_ref,
                  mx_ref, s_ref, q_ref):
    """Pass 3: recompute h2, z3 = conv3(h2); per-batch running max of raw z3
    plus its per-batch partial stats (for BN3)."""
    @pl.when(pl.program_id(1) == 0)
    def _():
        mx_ref[...] = jnp.full_like(mx_ref, -jnp.inf)
        s_ref[...] = jnp.zeros_like(s_ref)
        q_ref[...] = jnp.zeros_like(q_ref)

    h1 = jnp.maximum(_conv1(x_ref[...], w1_ref[...]) * a1_ref[...] + d1_ref[...], 0.0)
    z2 = jnp.dot(h1.astype(jnp.bfloat16), w2_ref[...],
                 preferred_element_type=jnp.float32)
    h2 = jnp.maximum(z2 * a2_ref[...] + d2_ref[...], 0.0)
    z3 = jnp.dot(h2.astype(jnp.bfloat16), w3_ref[...],
                 preferred_element_type=jnp.float32)             # (T, 1024)

    # relu(a3*z + d3) is monotone in z for a3 > 0 (gamma = 1 default), so the
    # BN3+ReLU+maxpool composition is finalized later on the pooled max; the
    # (B*N, 1024) activation never exists in HBM.
    mx_ref[0:1, :] = jnp.maximum(mx_ref[0:1, :], jnp.max(z3, axis=0, keepdims=True))
    s_ref[0:1, :] = s_ref[0:1, :] + jnp.sum(z3, axis=0, keepdims=True)
    q_ref[0:1, :] = q_ref[0:1, :] + jnp.sum(z3 * z3, axis=0, keepdims=True)


def _fc_kernel(p_ref, a3_ref, d3_ref,
               fw1_ref, fb1_ref, g4_ref, be4_ref,
               fw2_ref, fb2_ref, g5_ref, be5_ref,
               fw3_ref, fb3_ref, out_ref):
    """Tiny FC head on the (B, 1024) pooled features (single resident block)."""
    # BN3 finalize (global-stat affine) + ReLU on the pooled conv3 max.
    feat = jnp.maximum(p_ref[...] * a3_ref[...] + d3_ref[...], 0.0)      # (B, 1024)

    f = jnp.dot(feat.astype(jnp.bfloat16), fw1_ref[...],
                preferred_element_type=jnp.float32) + fb1_ref[...]
    f = jnp.maximum(_bn_train(f, g4_ref[...], be4_ref[...]), 0.0)        # (B, 512)

    f = jnp.dot(f.astype(jnp.bfloat16), fw2_ref[...],
                preferred_element_type=jnp.float32) + fb2_ref[...]
    f = jnp.maximum(_bn_train(f, g5_ref[...], be5_ref[...]), 0.0)        # (B, 256)

    # fc3 stays f32; output is lane-padded to 128 (sliced in the wrapper).
    out_ref[...] = jnp.dot(f, fw3_ref[...],
                           preferred_element_type=jnp.float32) + fb3_ref[...]


# ----------------------------------------------------------------------------
# Wrapper
# ----------------------------------------------------------------------------
def tnet_forward(x, params, k=3, max_tile_rows=512):
    """x: (B, k, N) float32 (PyTorch NCW).  Returns (B, k, k)."""
    (w1, b1, g1, be1, w2, b2, g2, be2, w3, b3, g3, be3,
     fw1, fb1, g4, be4, fw2, fb2, g5, be5, fw3, fb3) = params
    # Conv biases cancel exactly inside the following training-mode BatchNorm
    # ((z+b) - mean(z+b) == z - mean(z)); the pure-JAX reference keeps them.
    del b1, b2, b3

    B, kk, N = x.shape
    assert kk == k
    f32, bf16 = jnp.float32, jnp.bfloat16
    rows = B * N
    T = _pick_tile(N, max_tile_rows)
    Nt = N // T
    grid = (B, Nt)
    cparams = pltpu.CompilerParams(
        dimension_semantics=("parallel", "arbitrary"))   # batch // v7x megacore

    # (B, k, N) -> point-major rows (B*N, k); rows [b*N, (b+1)*N) == batch b.
    x2d = jnp.transpose(x, (0, 2, 1)).reshape(rows, k)

    # bf16 copies of the MXU weight operands (f32 accumulation in-kernel).
    w2b, w3b = w2.astype(bf16), w3.astype(bf16)
    fw1b, fw2b = fw1.astype(bf16), fw2.astype(bf16)

    x_spec = pl.BlockSpec((T, k), lambda b, t: (b * Nt + t, 0))
    const = lambda arr: pl.BlockSpec(arr.shape, lambda b, t: (0, 0))
    acc_spec = lambda C: pl.BlockSpec((8, C), lambda b, t: (b, 0))
    acc_shape = lambda C: jax.ShapeDtypeStruct((B * 8, C), f32)

    # ---- pass 1: stats of z1 = conv1(x) ------------------------------------
    s1, q1 = pl.pallas_call(
        _stats1_kernel, grid=grid,
        in_specs=[x_spec, const(w1)],
        out_specs=(acc_spec(64), acc_spec(64)),
        out_shape=(acc_shape(64), acc_shape(64)),
        compiler_params=cparams,
    )(x2d, w1)
    a1, d1 = _bn_affine(s1, q1, rows, g1, be1)

    # ---- pass 2: stats of z2 = conv2(relu(bn1(z1))) ------------------------
    s2, q2 = pl.pallas_call(
        _stats2_kernel, grid=grid,
        in_specs=[x_spec, const(w1), const(a1), const(d1), const(w2b)],
        out_specs=(acc_spec(128), acc_spec(128)),
        out_shape=(acc_shape(128), acc_shape(128)),
        compiler_params=cparams,
    )(x2d, w1, a1, d1, w2b)
    a2, d2 = _bn_affine(s2, q2, rows, g2, be2)

    # ---- pass 3: conv3 -> per-batch max + stats ----------------------------
    mx, s3, q3 = pl.pallas_call(
        _conv3_kernel, grid=grid,
        in_specs=[x_spec, const(w1), const(a1), const(d1),
                  const(w2b), const(a2), const(d2), const(w3b)],
        out_specs=(acc_spec(1024), acc_spec(1024), acc_spec(1024)),
        out_shape=(acc_shape(1024), acc_shape(1024), acc_shape(1024)),
        compiler_params=cparams,
    )(x2d, w1, a1, d1, w2b, a2, d2, w3b)
    a3, d3 = _bn_affine(s3, q3, rows, g3, be3)
    pooled = mx.reshape(B, 8, 1024)[:, 0, :]            # (B, 1024) raw conv3 max

    # ---- FC head (tiny, un-gridded) ----------------------------------------
    out_pad = 128
    fw3p = jnp.zeros((fw3.shape[0], out_pad), f32).at[:, :k * k].set(fw3)
    fb3p = jnp.zeros((1, out_pad), f32).at[:, :k * k].set(fb3)
    fc_args = (pooled, a3, d3, fw1b, fb1, g4, be4, fw2b, fb2, g5, be5, fw3p, fb3p)
    head = pl.pallas_call(
        _fc_kernel,
        out_shape=jax.ShapeDtypeStruct((B, out_pad), f32),
        in_specs=[pl.BlockSpec(memory_space=pltpu.MemorySpace.VMEM)] * len(fc_args),
        out_specs=pl.BlockSpec(memory_space=pltpu.MemorySpace.VMEM),
    )(*fc_args)

    eye = jnp.eye(k, dtype=f32).reshape(1, k * k)
    return (head[:, :k * k] + eye).reshape(B, k, k)


# ----------------------------------------------------------------------------
# Pure-JAX reference (mirrors the kernel's MXU numerics when mxu_bf16=True)
# ----------------------------------------------------------------------------
def tnet_reference(x, params, k=3, mxu_bf16=True):
    (w1, b1, g1, be1, w2, b2, g2, be2, w3, b3, g3, be3,
     fw1, fb1, g4, be4, fw2, fb2, g5, be5, fw3, fb3) = params
    B, _, N = x.shape
    pH = jax.lax.Precision.HIGHEST
    if mxu_bf16:
        rnd = lambda a: a.astype(jnp.bfloat16).astype(jnp.float32)
    else:
        rnd = lambda a: a
    mm = lambda a, b: jnp.dot(rnd(a), rnd(b), precision=pH,
                              preferred_element_type=jnp.float32)

    h = jnp.transpose(x, (0, 2, 1)).reshape(B * N, k)
    h = jnp.maximum(_bn_train(jnp.dot(h, w1, precision=pH) + b1, g1, be1), 0.0)
    h = jnp.maximum(_bn_train(mm(h, w2) + b2, g2, be2), 0.0)
    h = jnp.maximum(_bn_train(mm(h, w3) + b3, g3, be3), 0.0)
    pooled = jnp.max(h.reshape(B, N, -1), axis=1)
    f = jnp.maximum(_bn_train(mm(pooled, fw1) + fb1, g4, be4), 0.0)
    f = jnp.maximum(_bn_train(mm(f, fw2) + fb2, g5, be5), 0.0)
    m = (jnp.dot(f, fw3, precision=pH) + fb3
         + jnp.eye(k, dtype=jnp.float32).reshape(1, k * k))
    return m.reshape(B, k, k)


# ----------------------------------------------------------------------------
# Parameters (PyTorch default-init semantics: BN gamma=1, beta=0, train mode)
# ----------------------------------------------------------------------------
def make_params(key, k=3):
    ks = jax.random.split(key, 12)

    def w(key_, shape, scale):
        return jax.random.normal(key_, shape, jnp.float32) * scale

    ones = lambda c: jnp.ones((1, c), jnp.float32)
    zeros = lambda c: jnp.zeros((1, c), jnp.float32)

    w1, b1 = w(ks[0], (k, 64), 0.1), w(ks[1], (1, 64), 0.01)
    w2, b2 = w(ks[2], (64, 128), 0.05), w(ks[3], (1, 128), 0.01)
    w3, b3 = w(ks[4], (128, 1024), 0.03), w(ks[5], (1, 1024), 0.01)
    fw1, fb1 = w(ks[6], (1024, 512), 0.02), w(ks[7], (1, 512), 0.01)
    fw2, fb2 = w(ks[8], (512, 256), 0.03), w(ks[9], (1, 256), 0.01)
    fw3, fb3 = w(ks[10], (256, k * k), 0.03), w(ks[11], (1, k * k), 0.01)

    return (w1, b1, ones(64), zeros(64),
            w2, b2, ones(128), zeros(128),
            w3, b3, ones(1024), zeros(1024),
            fw1, fb1, ones(512), zeros(512),
            fw2, fb2, ones(256), zeros(256),
            fw3, fb3)


if __name__ == "__main__":
    k = 3
    B, N = 4, 256          # small: 4 point clouds x 256 points, k=3 channels
    key = jax.random.PRNGKey(0)
    kx, kp = jax.random.split(key)
    x = jax.random.normal(kx, (B, k, N), jnp.float32)
    params = make_params(kp, k=k)

    # max_tile_rows=64 -> grid (B, N/T) = (4, 4): exercises tiling + accumulators.
    out = jax.block_until_ready(tnet_forward(x, params, k=k, max_tile_rows=64))
    assert out.shape == (B, k, k)

    # Reference mirrors the kernel's bf16 MXU operands / f32 accumulation.
    # Tolerance is loose-ish because bf16 rounding plus training-mode BN over a
    # tiny batch amplifies benign rounding differences; real bugs are >> 1e-2.
    ref = tnet_reference(x, params, k=k, mxu_bf16=True)
    max_diff = float(jnp.max(jnp.abs(out - ref)))
    assert jnp.allclose(out, ref, atol=1e-2, rtol=1e-2), (
        "mismatch vs reference: max abs diff = %g" % max_diff)

    print("KERNEL_OK")
</pallas_src>

<mosaic_0001>
module attributes {stable_mosaic.version = 11 : i64} {
  func.func @_stats1_kernel(%arg0: i32, %arg1: i32, %arg2: memref<64x3xf32, #tpu.memory_space<vmem>>, %arg3: memref<3x64xf32, #tpu.memory_space<vmem>>, %arg4: memref<8x64xf32, #tpu.memory_space<vmem>>, %arg5: memref<8x64xf32, #tpu.memory_space<vmem>>) attributes {dimension_semantics = [#tpu.dimension_semantics<parallel>, #tpu.dimension_semantics<arbitrary>], iteration_bounds = array<i64: 4, 4>, scalar_prefetch = 0 : i64, scratch_operands = 0 : i64, tpu.core_type = #tpu.core_type<tc>, window_params = [{transform_indices = @transform_0, window_bounds = array<i64: 64, 3>}, {pipeline_mode = #tpu.pipeline_mode<synchronous>, transform_indices = @transform_1, window_bounds = array<i64: 3, 64>}, {transform_indices = @transform_2, window_bounds = array<i64: 8, 64>}, {transform_indices = @transform_3, window_bounds = array<i64: 8, 64>}]} {
    %c0_i32 = arith.constant 0 : i32
    %0 = arith.cmpi eq, %arg1, %c0_i32 : i32
    %1 = arith.extui %0 : i1 to i32
    %c0_i32_0 = arith.constant 0 : i32
    %2 = arith.cmpi ne, %1, %c0_i32_0 : i32
    scf.if %2 {
      %cst_13 = arith.constant 0.000000e+00 : f32
      %33 = vector.broadcast %cst_13 : f32 to vector<8x64xf32>
      %c0_14 = arith.constant 0 : index
      %c0_15 = arith.constant 0 : index
      %34 = vector.load %arg4[%c0_14, %c0_15] : memref<8x64xf32, #tpu.memory_space<vmem>>, vector<8x64xf32>
      tpu.vector_store %arg4[%c0_14, %c0_15], %33 {strides = array<i32>} : memref<8x64xf32, #tpu.memory_space<vmem>>, vector<8x64xf32>,
      %cst_16 = arith.constant 0.000000e+00 : f32
      %35 = vector.broadcast %cst_16 : f32 to vector<8x64xf32>
      %c0_17 = arith.constant 0 : index
      %c0_18 = arith.constant 0 : index
      %36 = vector.load %arg5[%c0_17, %c0_18] : memref<8x64xf32, #tpu.memory_space<vmem>>, vector<8x64xf32>
      tpu.vector_store %arg5[%c0_17, %c0_18], %35 {strides = array<i32>} : memref<8x64xf32, #tpu.memory_space<vmem>>, vector<8x64xf32>,
    } else {
    }
    %c0 = arith.constant 0 : index
    %c0_1 = arith.constant 0 : index
    %3 = vector.load %arg2[%c0, %c0_1] : memref<64x3xf32, #tpu.memory_space<vmem>>, vector<64x3xf32>
    %c0_2 = arith.constant 0 : index
    %c0_3 = arith.constant 0 : index
    %4 = vector.load %arg3[%c0_2, %c0_3] : memref<3x64xf32, #tpu.memory_space<vmem>>, vector<3x64xf32>
    %5 = vector.extract_strided_slice %3 {offsets = [0, 0], sizes = [64, 1], strides = [1, 1]} : vector<64x3xf32> to vector<64x1xf32>
    %6 = vector.extract_strided_slice %4 {offsets = [0, 0], sizes = [1, 64], strides = [1, 1]} : vector<3x64xf32> to vector<1x64xf32>
    %7 = vector.broadcast %5 : vector<64x1xf32> to vector<64x64xf32>
    %8 = vector.broadcast %6 : vector<1x64xf32> to vector<64x64xf32>
    %9 = arith.mulf %7, %8 : vector<64x64xf32>
    %10 = vector.extract_strided_slice %3 {offsets = [0, 1], sizes = [64, 1], strides = [1, 1]} : vector<64x3xf32> to vector<64x1xf32>
    %11 = vector.extract_strided_slice %4 {offsets = [1, 0], sizes = [1, 64], strides = [1, 1]} : vector<3x64xf32> to vector<1x64xf32>
    %12 = vector.broadcast %10 : vector<64x1xf32> to vector<64x64xf32>
    %13 = vector.broadcast %11 : vector<1x64xf32> to vector<64x64xf32>
    %14 = arith.mulf %12, %13 : vector<64x64xf32>
    %15 = arith.addf %9, %14 : vector<64x64xf32>
    %16 = vector.extract_strided_slice %3 {offsets = [0, 2], sizes = [64, 1], strides = [1, 1]} : vector<64x3xf32> to vector<64x1xf32>
    %17 = vector.extract_strided_slice %4 {offsets = [2, 0], sizes = [1, 64], strides = [1, 1]} : vector<3x64xf32> to vector<1x64xf32>
    %18 = vector.broadcast %16 : vector<64x1xf32> to vector<64x64xf32>
    %19 = vector.broadcast %17 : vector<1x64xf32> to vector<64x64xf32>
    %20 = arith.mulf %18, %19 : vector<64x64xf32>
    %21 = arith.addf %15, %20 : vector<64x64xf32>
    %c0_4 = arith.constant 0 : index
    %c0_5 = arith.constant 0 : index
    %22 = vector.load %arg4[%c0_4, %c0_5] : memref<8x64xf32, #tpu.memory_space<vmem>>, vector<1x64xf32>
    %cst = arith.constant dense<0.000000e+00> : vector<64xf32>
    %23 = vector.multi_reduction <add>, %21, %cst [0] : vector<64x64xf32> to vector<64xf32>
    %24 = vector.shape_cast %23 : vector<64xf32> to vector<1x64xf32>
    %25 = arith.addf %22, %24 : vector<1x64xf32>
    %c0_6 = arith.constant 0 : index
    %c0_7 = arith.constant 0 : index
    %26 = vector.load %arg4[%c0_6, %c0_7] : memref<8x64xf32, #tpu.memory_space<vmem>>, vector<1x64xf32>
    tpu.vector_store %arg4[%c0_6, %c0_7], %25 {strides = array<i32>} : memref<8x64xf32, #tpu.memory_space<vmem>>, vector<1x64xf32>,
    %c0_8 = arith.constant 0 : index
    %c0_9 = arith.constant 0 : index
    %27 = vector.load %arg5[%c0_8, %c0_9] : memref<8x64xf32, #tpu.memory_space<vmem>>, vector<1x64xf32>
    %28 = arith.mulf %21, %21 : vector<64x64xf32>
    %cst_10 = arith.constant dense<0.000000e+00> : vector<64xf32>
    %29 = vector.multi_reduction <add>, %28, %cst_10 [0] : vector<64x64xf32> to vector<64xf32>
    %30 = vector.shape_cast %29 : vector<64xf32> to vector<1x64xf32>
    %31 = arith.addf %27, %30 : vector<1x64xf32>
    %c0_11 = arith.constant 0 : index
    %c0_12 = arith.constant 0 : index
    %32 = vector.load %arg5[%c0_11, %c0_12] : memref<8x64xf32, #tpu.memory_space<vmem>>, vector<1x64xf32>
    tpu.vector_store %arg5[%c0_11, %c0_12], %31 {strides = array<i32>} : memref<8x64xf32, #tpu.memory_space<vmem>>, vector<1x64xf32>,
    return
  }
  func.func @transform_0(%arg0: i32, %arg1: i32) -> (i32, i32) {
    %c4_i32 = arith.constant 4 : i32
    %0 = arith.muli %arg0, %c4_i32 : i32
    %1 = arith.addi %0, %arg1 : i32
    %c0_i32 = arith.constant 0 : i32
    %c0_i32_0 = arith.constant 0 : i32
    return %1, %c0_i32 : i32, i32
  }
  func.func @transform_1(%arg0: i32, %arg1: i32) -> (i32, i32) {
    %c0_i32 = arith.constant 0 : i32
    %c0_i32_0 = arith.constant 0 : i32
    %c0_i32_1 = arith.constant 0 : i32
    return %c0_i32, %c0_i32_0 : i32, i32
  }
  func.func @transform_2(%arg0: i32, %arg1: i32) -> (i32, i32) {
    %c0_i32 = arith.constant 0 : i32
    %c0_i32_0 = arith.constant 0 : i32
    return %arg0, %c0_i32 : i32, i32
  }
  func.func @transform_3(%arg0: i32, %arg1: i32) -> (i32, i32) {
    %c0_i32 = arith.constant 0 : i32
    %c0_i32_0 = arith.constant 0 : i32
    return %arg0, %c0_i32 : i32, i32
  }
}

</mosaic_0001>

<llo_original>
// kernel: tpu_custom_call.1
$region0: #{tpu_custom_call.1}
  #allocation0 [shape = 'u32[]', space=smem, size = 0x4, offset = 0x4, fixed_abs, tag = 'smem constant byte address 0x4 - core index']
  #allocation1 [shape = 'u32[144,128]{1,0:T(1,128)}', space=vmem, size = 0x12000, scoped, tag = 'internal scratch']
  %s0 = inlined_call_operand.vmem [shape: f32[1024,3], index: 0, kind: input, shape index: {}]
  %s1 = inlined_call_operand.vmem [shape: f32[3,64], index: 1, kind: input, shape index: {}]
  %s2 = inlined_call_operand.hbm [shape: f32[32,64], index: 2, kind: output, shape index: {0}]
  %s3 = inlined_call_operand.hbm [shape: f32[32,64], index: 3, kind: output, shape index: {1}]
  %4 = xla_tuple %s2, %s3
  %s5 = sld [smem:[#allocation0]]
  $region53: #{tpu_custom_call.1} parent=0
    _
  %s7 = ssub.s32 1, %s5
  %s8 = scalar_select 0, %s7, %s5
  $region1: #{tpu_custom_call.1} parent=0
    #allocation2 [shape = 'u8[8192]{0}', space=vmem, size = 0x2000, scoped, tag = 'output window, operand 0']
    #allocation3 [shape = 's32[2]{0}', space=sflag, size = 0x8, scoped, tag = 'scoped memory for tpu_custom_call.1']
    #allocation4 [shape = 'u8[8192]{0}', space=vmem, size = 0x2000, scoped, tag = 'output window, operand 1']
    #allocation5 [shape = 's32[2]{0}', space=sflag, size = 0x8, scoped, tag = 'scoped memory for tpu_custom_call.1']
    %9 = vsyncpa [#allocation3], 0
    %s10 = scalar_lea.sflag [#allocation3], 1
    %11 = vsyncpa %s10, 0
    %12 = vsyncpa [#allocation5], 0
    %s13 = scalar_lea.sflag [#allocation5], 1
    %14 = vsyncpa %s13, 0
    loop: start=0, step=1, limit=18
    $region2: #{tpu_custom_call.1} parent=1 // loop_pre_header
      _
    $region3: #{tpu_custom_call.1} parent=1 // loop_header
      %s16 = sphi 0, %s20
      %p17 = scmp.ge.s32.totalorder %s16, 18
      %s23 = sphi 0, %s35
      %s24 = sphi 0, %s31
      %s25 = sphi 0, %s23
      %s26 = sphi 0, %s24
      %s27 = sphi 0, %s25
      %s28 = sphi 0, %s26
      %s42 = sphi 0, %s44
      %s45 = sphi 0, %s42
      %s46 = sphi 0, %s45
      %s62 = sphi 0, %s46
      %s66 = sphi 0, %s66
      %s68 = sphi 0, %s66
      %s69 = sphi 0, %s68
      %s83 = sphi 0, %s69
      %s89 = sphi 0, %s91
      %s92 = sphi 0, %s89
      %s93 = sphi 0, %s92
      %s109 = sphi 0, %s93
      %s115 = sphi 0, %s117
      %s118 = sphi 0, %s115
      %s119 = sphi 0, %s118
      %s135 = sphi 0, %s119
    $region4: #{tpu_custom_call.1} parent=1 // loop_header_branch
      %19 = sbr.rel (%p17) target = $region8
    $region5: #{tpu_custom_call.1} parent=1 // loop_body
      %s21 = ssub.s32 %s16, 1
      %s22 = ssub.s32 %s16, 2
      %s29 = sadd.s32 1, %s24
      %p30 = scmp.ge.s32.totalorder %s29, 4
      %s31 = scalar_select %p30, 0, %s29
      %s32 = sadd.s32 1, %s23
      %s33 = scalar_select %p30, %s32, %s23
      %p34 = scmp.ge.s32.totalorder %s33, 4
      %s35 = scalar_select %p34, 0, %s33
      %s36 = smul.u32 %s23, 4
      %s37 = sadd.s32 %s36, %s24
      %s38 = smul.u32 %s35, 4
      %s39 = sadd.s32 %s38, %s31
      %s40 = ssub.s32 %s37, %s39
      %p41 = scmp.eq.s32.totalorder %s40, 0
      %s43 = sadd.s32 %s42, 1
      %s44 = scalar_select %p41, %s42, %s43
      %p47 = pneg %p41
      %p48 = scmp.eq.s32.totalorder %s16, 15
      %p49 = por %p47, %p48
      %p50 = scmp.ne.s32.totalorder %s42, %s45
      %p51 = scmp.eq.s32.totalorder %s16, 0
      %p52 = por %p50, %p51
      %p53 = scmp.ne.s32.totalorder %s42, %s45
      %p54 = scmp.eq.s32.totalorder %s21, 15
      %p55 = por %p53, %p54
      %p56 = scmp.ne.s32.totalorder %s45, %s46
      %p57 = scmp.eq.s32.totalorder %s21, 0
      %p58 = por %p56, %p57
      %p59 = scmp.ne.s32.totalorder %s45, %s46
      %p60 = scmp.eq.s32.totalorder %s22, 15
      %p61 = por %p59, %p60
      %p63 = scmp.ne.s32.totalorder %s46, %s62
      %p64 = scmp.eq.s32.totalorder %s22, 0
      %p65 = por %p63, %p64
      %s67 = sadd.s32 %s66, 1
      %p70 = scmp.eq.s32.totalorder %s16, 15
      %p71 = scmp.ne.s32.totalorder %s66, %s68
      %p72 = scmp.eq.s32.totalorder %s16, 0
      %p73 = por %p71, %p72
      %p74 = scmp.ne.s32.totalorder %s66, %s68
      %p75 = scmp.eq.s32.totalorder %s21, 15
      %p76 = por %p74, %p75
      %p77 = scmp.ne.s32.totalorder %s68, %s69
      %p78 = scmp.eq.s32.totalorder %s21, 0
      %p79 = por %p77, %p78
      %p80 = scmp.ne.s32.totalorder %s68, %s69
      %p81 = scmp.eq.s32.totalorder %s22, 15
      %p82 = por %p80, %p81
      %p84 = scmp.ne.s32.totalorder %s69, %s83
      %p85 = scmp.eq.s32.totalorder %s22, 0
      %p86 = por %p84, %p85
      %s87 = ssub.s32 %s23, %s35
      %p88 = scmp.eq.s32.totalorder %s87, 0
      %s90 = sadd.s32 %s89, 1
      %s91 = scalar_select %p88, %s89, %s90
      %p94 = pneg %p88
      %p95 = scmp.eq.s32.totalorder %s16, 15
      %p96 = por %p94, %p95
      %p97 = scmp.ne.s32.totalorder %s89, %s92
      %p98 = scmp.eq.s32.totalorder %s16, 0
      %p99 = por %p97, %p98
      %p100 = scmp.ne.s32.totalorder %s89, %s92
      %p101 = scmp.eq.s32.totalorder %s21, 15
      %p102 = por %p100, %p101
      %p103 = scmp.ne.s32.totalorder %s92, %s93
      %p104 = scmp.eq.s32.totalorder %s21, 0
      %p105 = por %p103, %p104
      %p106 = scmp.ne.s32.totalorder %s92, %s93
      %p107 = scmp.eq.s32.totalorder %s22, 15
      %p108 = por %p106, %p107
      %p110 = scmp.ne.s32.totalorder %s93, %s109
      %p111 = scmp.eq.s32.totalorder %s22, 0
      %p112 = por %p110, %p111
      %s113 = ssub.s32 %s23, %s35
      %p114 = scmp.eq.s32.totalorder %s113, 0
      %s116 = sadd.s32 %s115, 1
      %s117 = scalar_select %p114, %s115, %s116
      %p120 = pneg %p114
      %p121 = scmp.eq.s32.totalorder %s16, 15
      %p122 = por %p120, %p121
      %p123 = scmp.ne.s32.totalorder %s115, %s118
      %p124 = scmp.eq.s32.totalorder %s16, 0
      %p125 = por %p123, %p124
      %p126 = scmp.ne.s32.totalorder %s115, %s118
      %p127 = scmp.eq.s32.totalorder %s21, 15
      %p128 = por %p126, %p127
      %p129 = scmp.ne.s32.totalorder %s118, %s119
      %p130 = scmp.eq.s32.totalorder %s21, 0
      %p131 = por %p129, %p130
      %p132 = scmp.ne.s32.totalorder %s118, %s119
      %p133 = scmp.eq.s32.totalorder %s22, 15
      %p134 = por %p132, %p133
      %p136 = scmp.ne.s32.totalorder %s119, %s135
      %p137 = scmp.eq.s32.totalorder %s22, 0
      %p138 = por %p136, %p137
      %p139 = scmp.le.s32.totalorder 1, %s16
      %p140 = scmp.lt.s32.totalorder %s16, 17
      %p141 = pnand %p139, %p140
      %p142 = pneg %p141
      // Predicated region
      $region9: #{tpu_custom_call.1} parent=5 // pred_check
        _
      $region10: #{tpu_custom_call.1} parent=5 // pred_check_branch
        %144 = sbr.rel (%p141) target = $region12
      $region11: #{tpu_custom_call.1} parent=5 // pred_region
        %s145 = ssub.s32 %s16, 1
        // Predicated region
        $region13: #{tpu_custom_call.1} parent=11 // pred_check
          %p146 = pneg %p79
        $region14: #{tpu_custom_call.1} parent=11 // pred_check_branch
          %148 = sbr.rel (%p146) target = $region16
        $region15: #{tpu_custom_call.1} parent=11 // pred_region
          _
        $region16: #{tpu_custom_call.1} parent=11 // pred_fallthru
          _
      $region12: #{tpu_custom_call.1} parent=5 // pred_fallthru
        _
      %p149 = scmp.lt.s32.totalorder %s16, 16
      // Predicated region
      $region17: #{tpu_custom_call.1} parent=5 // pred_check
        %p150 = pneg %p149
      $region18: #{tpu_custom_call.1} parent=5 // pred_check_branch
        %152 = sbr.rel (%p150) target = $region20
      $region19: #{tpu_custom_call.1} parent=5 // pred_region
        // Predicated region
        $region21: #{tpu_custom_call.1} parent=19 // pred_check
          %p153 = pneg %p52
        $region22: #{tpu_custom_call.1} parent=19 // pred_check_branch
          %155 = sbr.rel (%p153) target = $region24
        $region23: #{tpu_custom_call.1} parent=19 // pred_region
          %s156 = smul.u32 %s23, 4
          %s157 = sadd.s32 %s156, %s24
          %s158 = smul.u32 8, %s157
          %p159 = scmp.lt.s32.totalorder %s158, 127
          %s160 = scalar_select %p159, %s158, 127
          %s161 = smul.addr %s160, 8
          %s162 = scalar_lea.vmem %s0, %s161
          %s163 = smul.u32 %s23, 4
          %s164 = sadd.s32 %s163, %s24
          %s165 = smul.u32 8, %s164
        $region24: #{tpu_custom_call.1} parent=19 // pred_fallthru
          _
      $region20: #{tpu_custom_call.1} parent=5 // pred_fallthru
        _
      %p166 = scmp.le.s32.totalorder 1, %s16
      %p167 = scmp.lt.s32.totalorder %s16, 17
      %p168 = pnand %p166, %p167
      %p169 = pneg %p168
      // Predicated region
      $region25: #{tpu_custom_call.1} parent=5 // pred_check
        _
      $region26: #{tpu_custom_call.1} parent=5 // pred_check_branch
        %171 = sbr.rel (%p168) target = $region28
      $region27: #{tpu_custom_call.1} parent=5 // pred_region
        %s172 = ssub.s32 %s16, 1
        %s173 = smul.u32 %s25, 4
        %s174 = sadd.s32 %s173, %s26
        %s175 = smul.u32 8, %s174
        %p176 = scmp.lt.s32.totalorder %s175, 127
        %s177 = scalar_select %p176, %s175, 127
        %s178 = smul.addr %s177, 8
        %s179 = scalar_lea.vmem %s0, %s178
        %p180 = pneg %p58
        %p181 = pneg %p55
        %p182 = pneg %p79
        %p183 = pneg %p76
        %p184 = pneg %p105
        %p185 = pneg %p102
        %s186 = sand.u32 %s92, 1
        %s187 = scalar_lea.sflag [#allocation3], %s186
        %s188 = sand.u32 %s92, 1
        %s189 = smul.addr %s188, 8
        %s190 = scalar_lea.vmem [#allocation2], %s189
        %p191 = pneg %p131
        %p192 = pneg %p128
        %s193 = sand.u32 %s118, 1
        %s194 = scalar_lea.sflag [#allocation5], %s193
        %s195 = sand.u32 %s118, 1
        %s196 = smul.addr %s195, 8
        %s197 = scalar_lea.vmem [#allocation4], %s196
        %s198 = smul.u32 %s25, 4
        %s199 = sadd.s32 %s198, %s26
        %s200 = smul.u32 8, %s199
        %p201 = scmp.lt.s32.totalorder %s200, 127
        %s202 = scalar_select %p201, %s200, 127
        %s203 = smul.addr %s202, 8
        %s204 = scalar_lea.vmem %s0, %s203
        %s205 = smul.u32 %s25, 4
        %s206 = sadd.s32 %s205, %s26
        %s207 = smul.u32 8, %s206
        %p208 = scmp.eq.s32.totalorder %s26, 0
        // Predicated region
        $region29: #{tpu_custom_call.1} parent=27 // pred_check
          %p209 = pneg %p208
        $region30: #{tpu_custom_call.1} parent=27 // pred_check_branch
          %211 = sbr.rel (%p209) target = $region32
        $region31: #{tpu_custom_call.1} parent=27 // pred_region
          %vm212 = vcmask 523264
          %213 = vst.msk [vmem:[%s190] sm:$0xff] %vm212, 0.0
          %214 = vst.msk [vmem:[%s197] sm:$0xff] %vm212, 0.0
        $region32: #{tpu_custom_call.1} parent=27 // pred_fallthru
          _
        %v215 = vld [vmem:[%s204] sm:$0xff]
        %v216 = vld [vmem:[%s204 + $0x8] sm:$0xff]
        %v217 = vld [vmem:[%s204 + $0x10] sm:$0xff]
        %v218 = vld [vmem:[%s204 + $0x18] sm:$0xff]
        %v219 = vld [vmem:[%s204 + $0x20] sm:$0xff]
        %v220 = vld [vmem:[%s204 + $0x28] sm:$0xff]
        %v221 = vld [vmem:[%s204 + $0x30] sm:$0xff]
        %v222 = vld [vmem:[%s204 + $0x38] sm:$0xff]
        %v223 = vld [vmem:[%s1] sm:$0x7]
        %225 = vset.pattern.permute.xlu0 0
        %226 = vperm.xlu0 %225, %v215
        %v227 = vpop.permute.xlu0 %226
        %230 = vset.pattern.permute.xlu0 0
        %231 = vperm.xlu0 %230, %v216
        %v232 = vpop.permute.xlu0 %231
        %235 = vset.pattern.permute.xlu0 0
        %236 = vperm.xlu0 %235, %v217
        %v237 = vpop.permute.xlu0 %236
        %240 = vset.pattern.permute.xlu0 0
        %241 = vperm.xlu0 %240, %v218
        %v242 = vpop.permute.xlu0 %241
        %245 = vset.pattern.permute.xlu0 0
        %246 = vperm.xlu0 %245, %v219
        %v247 = vpop.permute.xlu0 %246
        %250 = vset.pattern.permute.xlu0 0
        %251 = vperm.xlu0 %250, %v220
        %v252 = vpop.permute.xlu0 %251
        %255 = vset.pattern.permute.xlu0 0
        %256 = vperm.xlu0 %255, %v221
        %v257 = vpop.permute.xlu0 %256
        %260 = vset.pattern.permute.xlu0 0
        %261 = vperm.xlu0 %260, %v222
        %v262 = vpop.permute.xlu0 %261
        %v264 = vlaneseq
        %v265 = vshrl.u32 %v264, 7
        %v266 = vsub.s32 0, %v265
        %v267 = vrot.slane %v223, %v266
        %v268 = vmul.f32 %v227, %v267
        %v269 = vmul.f32 %v232, %v267
        %v270 = vmul.f32 %v237, %v267
        %v271 = vmul.f32 %v242, %v267
        %v272 = vmul.f32 %v247, %v267
        %v273 = vmul.f32 %v252, %v267
        %v274 = vmul.f32 %v257, %v267
        %v275 = vmul.f32 %v262, %v267
        %276 = vset.pattern.permute.xlu0 1
        %277 = vperm.xlu0 %276, %v215
        %v278 = vpop.permute.xlu0 %277
        %280 = vset.pattern.permute.xlu0 1
        %281 = vperm.xlu0 %280, %v216
        %v282 = vpop.permute.xlu0 %281
        %284 = vset.pattern.permute.xlu0 1
        %285 = vperm.xlu0 %284, %v217
        %v286 = vpop.permute.xlu0 %285
        %288 = vset.pattern.permute.xlu0 1
        %289 = vperm.xlu0 %288, %v218
        %v290 = vpop.permute.xlu0 %289
        %292 = vset.pattern.permute.xlu0 1
        %293 = vperm.xlu0 %292, %v219
        %v294 = vpop.permute.xlu0 %293
        %296 = vset.pattern.permute.xlu0 1
        %297 = vperm.xlu0 %296, %v220
        %v298 = vpop.permute.xlu0 %297
        %300 = vset.pattern.permute.xlu0 1
        %301 = vperm.xlu0 %300, %v221
        %v302 = vpop.permute.xlu0 %301
        %304 = vset.pattern.permute.xlu0 1
        %305 = vperm.xlu0 %304, %v222
        %v306 = vpop.permute.xlu0 %305
        %v308 = vlaneseq
        %v309 = vshrl.u32 %v308, 7
        %v310 = vsub.s32 1, %v309
        %v311 = vrot.slane %v223, %v310
        %v312 = vmul.f32 %v278, %v311
        %v313 = vmul.f32 %v282, %v311
        %v314 = vmul.f32 %v286, %v311
        %v315 = vmul.f32 %v290, %v311
        %v316 = vmul.f32 %v294, %v311
        %v317 = vmul.f32 %v298, %v311
        %v318 = vmul.f32 %v302, %v311
        %v319 = vmul.f32 %v306, %v311
        %v320 = vadd.f32 %v268, %v312
        %v321 = vadd.f32 %v269, %v313
        %v322 = vadd.f32 %v270, %v314
        %v323 = vadd.f32 %v271, %v315
        %v324 = vadd.f32 %v272, %v316
        %v325 = vadd.f32 %v273, %v317
        %v326 = vadd.f32 %v274, %v318
        %v327 = vadd.f32 %v275, %v319
        %328 = vset.pattern.permute.xlu0 2
        %329 = vperm.xlu0 %328, %v215
        %v330 = vpop.permute.xlu0 %329
        %332 = vset.pattern.permute.xlu0 2
        %333 = vperm.xlu0 %332, %v216
        %v334 = vpop.permute.xlu0 %333
        %336 = vset.pattern.permute.xlu0 2
        %337 = vperm.xlu0 %336, %v217
        %v338 = vpop.permute.xlu0 %337
        %340 = vset.pattern.permute.xlu0 2
        %341 = vperm.xlu0 %340, %v218
        %v342 = vpop.permute.xlu0 %341
        %344 = vset.pattern.permute.xlu0 2
        %345 = vperm.xlu0 %344, %v219
        %v346 = vpop.permute.xlu0 %345
        %348 = vset.pattern.permute.xlu0 2
        %349 = vperm.xlu0 %348, %v220
        %v350 = vpop.permute.xlu0 %349
        %352 = vset.pattern.permute.xlu0 2
        %353 = vperm.xlu0 %352, %v221
        %v354 = vpop.permute.xlu0 %353
        %356 = vset.pattern.permute.xlu0 2
        %357 = vperm.xlu0 %356, %v222
        %v358 = vpop.permute.xlu0 %357
        %v360 = vlaneseq
        %v361 = vshrl.u32 %v360, 7
        %v362 = vsub.s32 2, %v361
        %v363 = vrot.slane %v223, %v362
        %v364 = vmul.f32 %v330, %v363
        %v365 = vmul.f32 %v334, %v363
        %v366 = vmul.f32 %v338, %v363
        %v367 = vmul.f32 %v342, %v363
        %v368 = vmul.f32 %v346, %v363
        %v369 = vmul.f32 %v350, %v363
        %v370 = vmul.f32 %v354, %v363
        %v371 = vmul.f32 %v358, %v363
        %v372 = vadd.f32 %v320, %v364
        %v373 = vadd.f32 %v321, %v365
        %v374 = vadd.f32 %v322, %v366
        %v375 = vadd.f32 %v323, %v367
        %v376 = vadd.f32 %v324, %v368
        %v377 = vadd.f32 %v325, %v369
        %v378 = vadd.f32 %v326, %v370
        %v379 = vadd.f32 %v327, %v371
        %v380 = vld [vmem:[%s190] sm:$0x1]
        %vm381 = vcmask 523264
        %v382 = vsel %vm381, %v372, 0.0
        %v383 = vsel %vm381, %v373, 0.0
        %v384 = vadd.f32 %v382, %v383
        %v385 = vsel %vm381, %v374, 0.0
        %v386 = vadd.f32 %v384, %v385
        %v387 = vsel %vm381, %v375, 0.0
        %v388 = vadd.f32 %v386, %v387
        %v389 = vsel %vm381, %v376, 0.0
        %v390 = vadd.f32 %v388, %v389
        %v391 = vsel %vm381, %v377, 0.0
        %v392 = vadd.f32 %v390, %v391
        %v393 = vsel %vm381, %v378, 0.0
        %v394 = vadd.f32 %v392, %v393
        %v395 = vsel %vm381, %v379, 0.0
        %v396 = vadd.f32 %v394, %v395
        %v397 = vrot.slane %v396, 4
        %v398 = vadd.f32 %v396, %v397
        %v399 = vrot.slane %v398, 2
        %v400 = vadd.f32 %v398, %v399
        %v401 = vrot.slane %v400, 1
        %v402 = vadd.f32 %v400, %v401
        %v403 = vadd.f32 %v380, %v402
        %vm404 = vcmask 516096
        %405 = vst.msk [vmem:[%s190] sm:$0x1] %vm404, %v403
        %v406 = vld [vmem:[%s197] sm:$0x1]
        %v407 = vmul.f32 %v372, %v372
        %v408 = vmul.f32 %v373, %v373
        %v409 = vmul.f32 %v374, %v374
        %v410 = vmul.f32 %v375, %v375
        %v411 = vmul.f32 %v376, %v376
        %v412 = vmul.f32 %v377, %v377
        %v413 = vmul.f32 %v378, %v378
        %v414 = vmul.f32 %v379, %v379
        %v415 = vsel %vm381, %v407, 0.0
        %v416 = vsel %vm381, %v408, 0.0
        %v417 = vadd.f32 %v415, %v416
        %v418 = vsel %vm381, %v409, 0.0
        %v419 = vadd.f32 %v417, %v418
        %v420 = vsel %vm381, %v410, 0.0
        %v421 = vadd.f32 %v419, %v420
        %v422 = vsel %vm381, %v411, 0.0
        %v423 = vadd.f32 %v421, %v422
        %v424 = vsel %vm381, %v412, 0.0
        %v425 = vadd.f32 %v423, %v424
        %v426 = vsel %vm381, %v413, 0.0
        %v427 = vadd.f32 %v425, %v426
        %v428 = vsel %vm381, %v414, 0.0
        %v429 = vadd.f32 %v427, %v428
        %v430 = vrot.slane %v429, 4
        %v431 = vadd.f32 %v429, %v430
        %v432 = vrot.slane %v431, 2
        %v433 = vadd.f32 %v431, %v432
        %v434 = vrot.slane %v433, 1
        %v435 = vadd.f32 %v433, %v434
        %v436 = vadd.f32 %v406, %v435
        %437 = vst.msk [vmem:[%s197] sm:$0x1] %vm404, %v436
        %s438 = sand.u32 %s92, 1
        %s439 = scalar_lea.sflag [#allocation3], %s438
        %s440 = sand.u32 %s92, 1
        %s441 = smul.addr %s440, 8
        %s442 = scalar_lea.vmem [#allocation2], %s441
        %s443 = sand.u32 %s118, 1
        %s444 = scalar_lea.sflag [#allocation5], %s443
        %s445 = sand.u32 %s118, 1
        %s446 = smul.addr %s445, 8
        %s447 = scalar_lea.vmem [#allocation4], %s446
        // Predicated region
        $region33: #{tpu_custom_call.1} parent=27 // pred_check
          %p448 = pneg %p102
        $region34: #{tpu_custom_call.1} parent=27 // pred_check_branch
          %450 = sbr.rel (%p448) target = $region36
        $region35: #{tpu_custom_call.1} parent=27 // pred_region
          %s452 = ssub.s32 128, 128
          %453 = vsyncadd %s439, %s452
          %s454 = smul.addr %s25, 128
          %s455 = scalar_lea.hbm %s2, %s454
          %s457 = sshll.u32 %s442, 4
          %s458 = int_to_ptr.vmem [resolvable:$true] %s457
          %460 = dma.vmem_to_hbm [thread:$0]  %s458, 128, %s455, %s439
        $region36: #{tpu_custom_call.1} parent=27 // pred_fallthru
          _
        // Predicated region
        $region37: #{tpu_custom_call.1} parent=27 // pred_check
          %p461 = pneg %p128
        $region38: #{tpu_custom_call.1} parent=27 // pred_check_branch
          %463 = sbr.rel (%p461) target = $region40
        $region39: #{tpu_custom_call.1} parent=27 // pred_region
          %s465 = ssub.s32 128, 128
          %466 = vsyncadd %s444, %s465
          %s467 = smul.addr %s25, 128
          %s468 = scalar_lea.hbm %s3, %s467
          %s470 = sshll.u32 %s447, 4
          %s471 = int_to_ptr.vmem [resolvable:$true] %s470
          %473 = dma.vmem_to_hbm [thread:$0]  %s471, 128, %s468, %s444
        $region40: #{tpu_custom_call.1} parent=27 // pred_fallthru
          _
      $region28: #{tpu_custom_call.1} parent=5 // pred_fallthru
        _
      %p474 = scmp.le.s32.totalorder 2, %s16
      // Predicated region
      $region41: #{tpu_custom_call.1} parent=5 // pred_check
        %p475 = pneg %p474
      $region42: #{tpu_custom_call.1} parent=5 // pred_check_branch
        %477 = sbr.rel (%p475) target = $region44
      $region43: #{tpu_custom_call.1} parent=5 // pred_region
        %s478 = ssub.s32 %s16, 2
        // Predicated region
        $region45: #{tpu_custom_call.1} parent=43 // pred_check
          %p479 = pneg %p108
        $region46: #{tpu_custom_call.1} parent=43 // pred_check_branch
          %481 = sbr.rel (%p479) target = $region48
        $region47: #{tpu_custom_call.1} parent=43 // pred_region
          %s482 = sand.u32 %s93, 1
          %s483 = scalar_lea.sflag [#allocation3], %s482
          %s484 = sand.u32 %s93, 1
          %s485 = smul.addr %s484, 8
          %s486 = scalar_lea.vmem [#allocation2], %s485
          %487 = dma.done %s483, 128
        $region48: #{tpu_custom_call.1} parent=43 // pred_fallthru
          _
        // Predicated region
        $region49: #{tpu_custom_call.1} parent=43 // pred_check
          %p488 = pneg %p134
        $region50: #{tpu_custom_call.1} parent=43 // pred_check_branch
          %490 = sbr.rel (%p488) target = $region52
        $region51: #{tpu_custom_call.1} parent=43 // pred_region
          %s491 = sand.u32 %s119, 1
          %s492 = scalar_lea.sflag [#allocation5], %s491
          %s493 = sand.u32 %s119, 1
          %s494 = smul.addr %s493, 8
          %s495 = scalar_lea.vmem [#allocation4], %s494
          %496 = dma.done %s492, 128
        $region52: #{tpu_custom_call.1} parent=43 // pred_fallthru
          _
      $region44: #{tpu_custom_call.1} parent=5 // pred_fallthru
        _
    $region6: #{tpu_custom_call.1} parent=1 // loop_footer
      %s20 = sadd.s32 1, %s16
    $region7: #{tpu_custom_call.1} parent=1 // loop_footer_branch
      %15 = sbr.rel target = $region3
    $region8: #{tpu_custom_call.1} parent=1 // loop_exit
      _
    %497 = vsyncpa [#allocation3], 1
    %s498 = scalar_lea.sflag [#allocation3], 1
    %499 = vsyncpa %s498, 1
    %500 = vsyncpa [#allocation5], 1
    %s501 = scalar_lea.sflag [#allocation5], 1
    %502 = vsyncpa %s501, 1

</llo_original>
